<compile_context>
chip_gen: v7x
topology: tpu7x:2x2x1
jax: 0.10.0
libtpu: 0.0.40
codegen_flags: <defaults>
</compile_context>

<pallas_src>
import jax
import jax.numpy as jnp
import numpy as np
from jax import lax
from jax.experimental import pallas as pl
from jax.experimental.pallas import tpu as pltpu


def _lut_kernel(x_ref, cp_ref, lut_ref, o_ref):
    # x_ref:   (TB, C)   input tile, batch on sublanes / candidates on lanes
    # cp_ref:  (K, C)    choice logits for this module (candidates on lanes)
    # lut_ref: (2**K, 1) row-major flattened LUT logits for this module
    # o_ref:   (1, TB)   output tile, batch on lanes (lane-dense store)
    x = x_ref[...].astype(jnp.float32)
    cp = cp_ref[...].astype(jnp.float32)
    lut = lut_ref[...].astype(jnp.float32)
    K = cp.shape[0]

    # Softmax over the candidate axis (== dim=0 of the module's choice_parameters).
    # Exact divide kept for the 1e-5 reference tolerance.
    m = jnp.max(cp, axis=1, keepdims=True)
    e = jnp.exp(cp - m)
    soft = e / jnp.sum(e, axis=1, keepdims=True)                 # (K, C)

    # Input-line signals with batch on LANES: contract over the shared last dim C.
    # (No wrapper transpose of x; this is one small MXU matmul.)
    s_t = lax.dot_general(soft, x, (((1,), (1,)), ((), ())),
                          preferred_element_type=jnp.float32)    # (K, TB)

    # Constrained LUT: sigmoid of the (2**K, 1) logits.
    lut_sig = 1.0 / (1.0 + jnp.exp(-lut))                        # (2**K, 1)

    # Pairwise-halving multilinear interpolation (MSB-first, matches the
    # row-major flatten and the PyTorch recursion order):
    #   r <- s_d * r_top + (1 - s_d) * r_bot,  sublane count halves each step.
    r = lut_sig
    half = r.shape[0]
    for d in range(K):
        half //= 2
        s_d = s_t[d:d + 1, :]                                    # (1, TB)
        r = s_d * r[:half, :] + (1.0 - s_d) * r[half:, :]        # (half, TB)

    o_ref[...] = r.astype(o_ref.dtype)                           # (1, TB)


def lut_forward_stacked(x, cp_stack, lut_stack):
    """M LUT modules sharing the same input, fused into ONE pallas_call.

    x:         (B, C)
    cp_stack:  (M, C, K)   stacked choice_parameters
    lut_stack: (M, 2, ..., 2) stacked LUT tensors (K twos)
    Returns:   (M, B)
    """
    x = jnp.asarray(x)
    cp_stack = jnp.asarray(cp_stack)
    lut_stack = jnp.asarray(lut_stack)

    B, C = x.shape
    M, _, K = cp_stack.shape
    n = 2 ** K

    # Tiny per-module params: pre-transpose cp (K on sublanes, candidates on
    # lanes) and flatten the LUT row-major to a column. Negligible traffic.
    cp_t = jnp.transpose(cp_stack, (0, 2, 1))                    # (M, K, C)
    lut_col = jnp.reshape(lut_stack, (M, n, 1))                  # (M, 2**K, 1)

    # Batch tile on the lane axis. Large tiles (512-1024) amortize the ~0.35 us
    # per-grid-step overhead; with a single module keep >= 2 batch tiles so the
    # "parallel" grid still shards across both v7x TensorCores.
    if B <= 128:
        TB = B
    else:
        min_tiles = 2 if M == 1 else 1
        TB = min(1024, pl.cdiv(pl.cdiv(B, min_tiles), 128) * 128)

    nb = pl.cdiv(B, TB)
    grid = (nb, M)   # batch tile outermost: x stays resident across the module loop

    # Advisory cost hint so XLA schedules around this tiny custom call sensibly.
    flops = M * (2 * K * C * B + 3 * n * B + 5 * K * C)
    transcendentals = M * (K * C + n)
    bytes_accessed = 4 * (B * C + M * (C * K + n) + M * B)

    out = pl.pallas_call(
        _lut_kernel,
        out_shape=jax.ShapeDtypeStruct((M, 1, B), x.dtype),
        grid=grid,
        in_specs=[
            # x tiled on batch only; block index independent of m -> no re-DMA
            # while iterating modules for a fixed batch tile.
            pl.BlockSpec((TB, C), lambda i, m: (i, 0)),
            pl.BlockSpec((None, K, C), lambda i, m: (m, 0, 0)),
            pl.BlockSpec((None, n, 1), lambda i, m: (m, 0, 0)),
        ],
        out_specs=pl.BlockSpec((None, 1, TB), lambda i, m: (m, 0, i)),
        compiler_params=pltpu.CompilerParams(
            dimension_semantics=("parallel", "parallel")),
        cost_estimate=pl.CostEstimate(
            flops=flops,
            transcendentals=transcendentals,
            bytes_accessed=bytes_accessed),
    )(x, cp_t, lut_col)

    return out.reshape(M, B)


def lut_forward(x, choice_parameters, lut_table):
    """Single-module forward matching the PyTorch LUT.forward.

    x: (B, C); choice_parameters: (C, K); lut_table: [2]*K.  Returns (B, 1).
    """
    out = lut_forward_stacked(x, choice_parameters[None], lut_table[None])   # (1, B)
    return out[0][:, None]                                                   # (B, 1)


def lut_forward_ref(x, choice_parameters, lut_table):
    """Pure-JAX reference mirroring the PyTorch recursion."""
    soft = jax.nn.softmax(choice_parameters, axis=0)
    s = x @ soft                                                 # (B, K)
    lut_sig = jax.nn.sigmoid(lut_table)
    K = choice_parameters.shape[1]

    def soft_lookup(fixed):
        d = len(fixed)
        if d == K:
            return lut_sig[tuple(fixed)]
        return (s[:, d] * soft_lookup(fixed + [0])
                + (1 - s[:, d]) * soft_lookup(fixed + [1]))

    return soft_lookup([])[:, None]


if __name__ == "__main__":
    # Module hyper-params (small, consistent with defaults): input_count=4.
    batch = 8
    input_candidates = 16
    input_count = 4

    key = jax.random.PRNGKey(0)
    kx, kcp, klut, kcps, kluts = jax.random.split(key, 5)

    # Synthetic parameters matching the module's __init__ shapes:
    #   choice_parameters ~ U[0,1) (torch.rand),  lut ~ N(0,1) (torch.randn).
    x = jax.random.normal(kx, (batch, input_candidates), dtype=jnp.float32)
    choice_parameters = jax.random.uniform(
        kcp, (input_candidates, input_count), dtype=jnp.float32)
    lut_table = jax.random.normal(
        klut, tuple(2 for _ in range(input_count)), dtype=jnp.float32)

    # Single-module path (matches LUT.forward semantics exactly).
    out = jax.block_until_ready(lut_forward(x, choice_parameters, lut_table))
    ref = lut_forward_ref(x, choice_parameters, lut_table)
    np.testing.assert_allclose(np.asarray(out), np.asarray(ref),
                               rtol=1e-5, atol=1e-5)
    assert out.shape == (batch, 1)

    # Stacked path: M modules sharing x, one pallas_call (production pattern).
    M = 3
    cp_stack = jax.random.uniform(
        kcps, (M, input_candidates, input_count), dtype=jnp.float32)
    lut_stack = jax.random.normal(
        kluts, (M,) + tuple(2 for _ in range(input_count)), dtype=jnp.float32)
    out_stack = jax.block_until_ready(lut_forward_stacked(x, cp_stack, lut_stack))
    ref_stack = jnp.stack(
        [lut_forward_ref(x, cp_stack[mi], lut_stack[mi])[:, 0] for mi in range(M)])
    np.testing.assert_allclose(np.asarray(out_stack), np.asarray(ref_stack),
                               rtol=1e-5, atol=1e-5)

    # TODO(synk): sharpening_loss (entropy regularizer) is training-only and
    # intentionally not part of this forward kernel.
    print("KERNEL_OK")
</pallas_src>

<mosaic_0001>
module attributes {stable_mosaic.version = 11 : i64} {
  func.func @_lut_kernel(%arg0: i32, %arg1: i32, %arg2: memref<8x16xf32, #tpu.memory_space<vmem>>, %arg3: memref<1x4x16xf32, #tpu.memory_space<vmem>>, %arg4: memref<1x16x1xf32, #tpu.memory_space<vmem>>, %arg5: memref<1x1x8xf32, #tpu.memory_space<vmem>>) attributes {dimension_semantics = [#tpu.dimension_semantics<parallel>, #tpu.dimension_semantics<parallel>], iteration_bounds = array<i64: 1, 1>, scalar_prefetch = 0 : i64, scratch_operands = 0 : i64, tpu.core_type = #tpu.core_type<tc>, window_params = [{transform_indices = @transform_0, window_bounds = array<i64: 8, 16>}, {transform_indices = @transform_1, window_bounds = array<i64: 1, 4, 16>}, {transform_indices = @transform_2, window_bounds = array<i64: 1, 16, 1>}, {transform_indices = @transform_3, window_bounds = array<i64: 1, 1, 8>}]} {
    %c0 = arith.constant 0 : index
    %c0_0 = arith.constant 0 : index
    %0 = vector.load %arg2[%c0, %c0_0] : memref<8x16xf32, #tpu.memory_space<vmem>>, vector<8x16xf32>
    %c0_1 = arith.constant 0 : index
    %c0_2 = arith.constant 0 : index
    %c0_3 = arith.constant 0 : index
    %1 = vector.load %arg3[%c0_1, %c0_2, %c0_3] : memref<1x4x16xf32, #tpu.memory_space<vmem>>, vector<1x4x16xf32>
    %2 = vector.shape_cast %1 : vector<1x4x16xf32> to vector<4x16xf32>
    %c0_4 = arith.constant 0 : index
    %c0_5 = arith.constant 0 : index
    %c0_6 = arith.constant 0 : index
    %3 = vector.load %arg4[%c0_4, %c0_5, %c0_6] : memref<1x16x1xf32, #tpu.memory_space<vmem>>, vector<1x16x1xf32>
    %4 = vector.shape_cast %3 : vector<1x16x1xf32> to vector<16x1xf32>
    %cst = arith.constant dense<0xFF800000> : vector<4xf32>
    %5 = vector.multi_reduction <maximumf>, %2, %cst [1] : vector<4x16xf32> to vector<4xf32>
    %6 = vector.shape_cast %5 : vector<4xf32> to vector<4x1xf32>
    %7 = vector.broadcast %6 : vector<4x1xf32> to vector<4x16xf32>
    %8 = arith.subf %2, %7 : vector<4x16xf32>
    %9 = math.exp %8 : vector<4x16xf32>
    %cst_7 = arith.constant dense<0.000000e+00> : vector<4xf32>
    %10 = vector.multi_reduction <add>, %9, %cst_7 [1] : vector<4x16xf32> to vector<4xf32>
    %11 = vector.shape_cast %10 : vector<4xf32> to vector<4x1xf32>
    %12 = vector.broadcast %11 : vector<4x1xf32> to vector<4x16xf32>
    %13 = arith.divf %9, %12 : vector<4x16xf32>
    %cst_8 = arith.constant dense<0.000000e+00> : vector<4x8xf32>
    %14 = tpu.matmul %13, %0, %cst_8 {dimension_numbers = #tpu.dot_dimension_numbers<[1], [1], [0], [0], [0, 0, 1, 0], [], []>} : vector<4x16xf32>, vector<8x16xf32>, vector<4x8xf32> -> vector<4x8xf32>
    %cst_9 = arith.constant 0.000000e+00 : f32
    %15 = vector.broadcast %cst_9 : f32 to vector<16x1xf32>
    %16 = arith.subf %15, %4 : vector<16x1xf32>
    %17 = math.exp %16 : vector<16x1xf32>
    %cst_10 = arith.constant 1.000000e+00 : f32
    %18 = vector.broadcast %cst_10 : f32 to vector<16x1xf32>
    %19 = arith.addf %18, %17 : vector<16x1xf32>
    %cst_11 = arith.constant 1.000000e+00 : f32
    %20 = vector.broadcast %cst_11 : f32 to vector<16x1xf32>
    %21 = arith.divf %20, %19 : vector<16x1xf32>
    %22 = vector.extract_strided_slice %14 {offsets = [0, 0], sizes = [1, 8], strides = [1, 1]} : vector<4x8xf32> to vector<1x8xf32>
    %23 = vector.extract_strided_slice %21 {offsets = [0, 0], sizes = [8, 1], strides = [1, 1]} : vector<16x1xf32> to vector<8x1xf32>
    %24 = vector.broadcast %22 : vector<1x8xf32> to vector<8x8xf32>
    %25 = vector.broadcast %23 : vector<8x1xf32> to vector<8x8xf32>
    %26 = arith.mulf %24, %25 : vector<8x8xf32>
    %cst_12 = arith.constant 1.000000e+00 : f32
    %27 = vector.broadcast %cst_12 : f32 to vector<1x8xf32>
    %28 = arith.subf %27, %22 : vector<1x8xf32>
    %29 = vector.extract_strided_slice %21 {offsets = [8, 0], sizes = [8, 1], strides = [1, 1]} : vector<16x1xf32> to vector<8x1xf32>
    %30 = vector.broadcast %28 : vector<1x8xf32> to vector<8x8xf32>
    %31 = vector.broadcast %29 : vector<8x1xf32> to vector<8x8xf32>
    %32 = arith.mulf %30, %31 : vector<8x8xf32>
    %33 = arith.addf %26, %32 : vector<8x8xf32>
    %34 = vector.extract_strided_slice %14 {offsets = [1, 0], sizes = [1, 8], strides = [1, 1]} : vector<4x8xf32> to vector<1x8xf32>
    %35 = vector.extract_strided_slice %33 {offsets = [0, 0], sizes = [4, 8], strides = [1, 1]} : vector<8x8xf32> to vector<4x8xf32>
    %36 = vector.broadcast %34 : vector<1x8xf32> to vector<4x8xf32>
    %37 = arith.mulf %36, %35 : vector<4x8xf32>
    %cst_13 = arith.constant 1.000000e+00 : f32
    %38 = vector.broadcast %cst_13 : f32 to vector<1x8xf32>
    %39 = arith.subf %38, %34 : vector<1x8xf32>
    %40 = vector.extract_strided_slice %33 {offsets = [4, 0], sizes = [4, 8], strides = [1, 1]} : vector<8x8xf32> to vector<4x8xf32>
    %41 = vector.broadcast %39 : vector<1x8xf32> to vector<4x8xf32>
    %42 = arith.mulf %41, %40 : vector<4x8xf32>
    %43 = arith.addf %37, %42 : vector<4x8xf32>
    %44 = vector.extract_strided_slice %14 {offsets = [2, 0], sizes = [1, 8], strides = [1, 1]} : vector<4x8xf32> to vector<1x8xf32>
    %45 = vector.extract_strided_slice %43 {offsets = [0, 0], sizes = [2, 8], strides = [1, 1]} : vector<4x8xf32> to vector<2x8xf32>
    %46 = vector.broadcast %44 : vector<1x8xf32> to vector<2x8xf32>
    %47 = arith.mulf %46, %45 : vector<2x8xf32>
    %cst_14 = arith.constant 1.000000e+00 : f32
    %48 = vector.broadcast %cst_14 : f32 to vector<1x8xf32>
    %49 = arith.subf %48, %44 : vector<1x8xf32>
    %50 = vector.extract_strided_slice %43 {offsets = [2, 0], sizes = [2, 8], strides = [1, 1]} : vector<4x8xf32> to vector<2x8xf32>
    %51 = vector.broadcast %49 : vector<1x8xf32> to vector<2x8xf32>
    %52 = arith.mulf %51, %50 : vector<2x8xf32>
    %53 = arith.addf %47, %52 : vector<2x8xf32>
    %54 = vector.extract_strided_slice %14 {offsets = [3, 0], sizes = [1, 8], strides = [1, 1]} : vector<4x8xf32> to vector<1x8xf32>
    %55 = vector.extract_strided_slice %53 {offsets = [0, 0], sizes = [1, 8], strides = [1, 1]} : vector<2x8xf32> to vector<1x8xf32>
    %56 = arith.mulf %54, %55 : vector<1x8xf32>
    %cst_15 = arith.constant 1.000000e+00 : f32
    %57 = vector.broadcast %cst_15 : f32 to vector<1x8xf32>
    %58 = arith.subf %57, %54 : vector<1x8xf32>
    %59 = vector.extract_strided_slice %53 {offsets = [1, 0], sizes = [1, 8], strides = [1, 1]} : vector<2x8xf32> to vector<1x8xf32>
    %60 = arith.mulf %58, %59 : vector<1x8xf32>
    %61 = arith.addf %56, %60 : vector<1x8xf32>
    %c0_16 = arith.constant 0 : index
    %c0_17 = arith.constant 0 : index
    %c0_18 = arith.constant 0 : index
    %62 = vector.load %arg5[%c0_16, %c0_17, %c0_18] : memref<1x1x8xf32, #tpu.memory_space<vmem>>, vector<1x1x8xf32>
    %63 = vector.shape_cast %62 : vector<1x1x8xf32> to vector<1x8xf32>
    %64 = vector.shape_cast %61 : vector<1x8xf32> to vector<1x1x8xf32>
    tpu.vector_store %arg5[%c0_16, %c0_17, %c0_18], %64 {strides = array<i32>} : memref<1x1x8xf32, #tpu.memory_space<vmem>>, vector<1x1x8xf32>,
    return
  }
  func.func @transform_0(%arg0: i32, %arg1: i32) -> (i32, i32) {
    %c0_i32 = arith.constant 0 : i32
    %c0_i32_0 = arith.constant 0 : i32
    return %arg0, %c0_i32 : i32, i32
  }
  func.func @transform_1(%arg0: i32, %arg1: i32) -> (i32, i32, i32) {
    %c0_i32 = arith.constant 0 : i32
    %c0_i32_0 = arith.constant 0 : i32
    %c0_i32_1 = arith.constant 0 : i32
    return %arg1, %c0_i32, %c0_i32_0 : i32, i32, i32
  }
  func.func @transform_2(%arg0: i32, %arg1: i32) -> (i32, i32, i32) {
    %c0_i32 = arith.constant 0 : i32
    %c0_i32_0 = arith.constant 0 : i32
    %c0_i32_1 = arith.constant 0 : i32
    return %arg1, %c0_i32, %c0_i32_0 : i32, i32, i32
  }
  func.func @transform_3(%arg0: i32, %arg1: i32) -> (i32, i32, i32) {
    %c0_i32 = arith.constant 0 : i32
    %c0_i32_0 = arith.constant 0 : i32
    return %arg1, %c0_i32, %arg0 : i32, i32, i32
  }
}

</mosaic_0001>

<llo_original>
// kernel: tpu_custom_call.1
$region0: #{tpu_custom_call.1}
  #allocation0 [shape = 'u32[]', space=smem, size = 0x4, offset = 0x4, fixed_abs, tag = 'smem constant byte address 0x4 - core index']
  #allocation1 [shape = 'u32[144,128]{1,0:T(1,128)}', space=vmem, size = 0x12000, scoped, tag = 'internal scratch']
  %s0 = inlined_call_operand.vmem [shape: f32[8,16], index: 0, kind: input, shape index: {}]
  %s1 = inlined_call_operand.vmem [shape: f32[1,4,16], index: 1, kind: input, shape index: {}]
  %s2 = inlined_call_operand.vmem [shape: f32[1,16,1], index: 2, kind: input, shape index: {}]
  %s3 = inlined_call_operand.hbm [shape: f32[1,1,8], index: 3, kind: output, shape index: {}]
  %s4 = sld [smem:[#allocation0]]
  $region22: #{tpu_custom_call.1} parent=0
    _
  %s6 = ssub.s32 1, %s4
  %s7 = scalar_select 0, %s6, %s4
  $region1: #{tpu_custom_call.1} parent=0
    #allocation2 [shape = 'u8[512]{0}', space=vmem, size = 0x400, scoped, tag = 'output window, operand 0, single buffered']
    #allocation3 [shape = 's32[1]{0}', space=sflag, size = 0x4, scoped, tag = 'scoped memory for tpu_custom_call.1']
    %8 = vsyncpa [#allocation3], 0
    // Predicated region
    $region2: #{tpu_custom_call.1} parent=1 // pred_check
      _
    $region3: #{tpu_custom_call.1} parent=1 // pred_check_branch
      %10 = sbr.rel (0) target = $region5
    $region4: #{tpu_custom_call.1} parent=1 // pred_region
      _
    $region5: #{tpu_custom_call.1} parent=1 // pred_fallthru
      _
    // Predicated region
    $region6: #{tpu_custom_call.1} parent=1 // pred_check
      _
    $region7: #{tpu_custom_call.1} parent=1 // pred_check_branch
      %12 = sbr.rel (0) target = $region9
    $region8: #{tpu_custom_call.1} parent=1 // pred_region
      _
    $region9: #{tpu_custom_call.1} parent=1 // pred_fallthru
      _
    // Predicated region
    $region10: #{tpu_custom_call.1} parent=1 // pred_check
      _
    $region11: #{tpu_custom_call.1} parent=1 // pred_check_branch
      %14 = sbr.rel (0) target = $region13
    $region12: #{tpu_custom_call.1} parent=1 // pred_region
      _
    $region13: #{tpu_custom_call.1} parent=1 // pred_fallthru
      _
    %v15 = vld [vmem:[%s0] sm:$0xff]
    %v16 = vld [vmem:[%s1] sm:$0xf]
    %v17 = vld [vmem:[%s2] sm:$0xff]
    %v18 = vld [vmem:[%s2 + $0x8] sm:$0xff]
    %vm19 = vcmask 125952
    %v20 = vsel %vm19, %v16, -inf
    %21 = vmax.xlane.f32.xlu0 %v20
    %v22 = vpop.xlane.xlu0 %21
    %v23 = vsub.f32 %v16, %v22
    %v24 = vmul.f32 %v23, 1.442695
    %v25 = vpow.pop %v24
    %v26 = vsel %vm19, %v25, 0.0
    %27 = vadd.xlane.f32.xlu0 %v26
    %v28 = vpop.xlane.xlu0 %27
    %v29 = vrcp.pop %v28
    %v30 = vmul.f32 %v25, %v29
    %vm31 = vcmask 130048
    %v33 = vsel %vm31, %v30, 0
    %v36 = vsel %vm31, %v15, 0
    %38 = vmatprep.subr.mxu0 0.0
    %39 = vmatpush1.xpose.msra.mxu0 %v36
    %40 = vmatprep.subr.mxu0 0.0
    %41 = vmatpush1.xpose.msra.mxu0 0.0
    %42 = vmatprep.subr.mxu0 0.0
    %43 = vmatpush1.xpose.msra.mxu0 0.0
    %44 = vmatprep.subr.mxu0 0.0
    %45 = vmatpush1.xpose.msra.mxu0 0.0
    %46 = vmatprep.subr.mxu0 0.0
    %47 = vmatpush1.xpose.msra.mxu0 0.0
    %48 = vmatprep.subr.mxu0 0.0
    %49 = vmatpush1.xpose.msra.mxu0 0.0
    %50 = vmatprep.subr.mxu0 0.0
    %51 = vmatpush1.xpose.msra.mxu0 0.0
    %52 = vmatprep.subr.mxu0 0.0
    %53 = vmatpush1.xpose.msra.mxu0 0.0
    %54 = vmatprep.subr.mxu0 0.0
    %55 = vmatpush1.xpose.msra.mxu0 0.0
    %56 = vmatprep.subr.mxu0 0.0
    %57 = vmatpush1.xpose.msra.mxu0 0.0
    %58 = vmatprep.subr.mxu0 0.0
    %59 = vmatpush1.xpose.msra.mxu0 0.0
    %60 = vmatprep.subr.mxu0 0.0
    %61 = vmatpush1.xpose.msra.mxu0 0.0
    %62 = vmatprep.subr.mxu0 0.0
    %63 = vmatpush1.xpose.msra.mxu0 0.0
    %64 = vmatprep.subr.mxu0 0.0
    %65 = vmatpush1.xpose.msra.mxu0 0.0
    %66 = vmatprep.subr.mxu0 0.0
    %67 = vmatpush1.xpose.msra.mxu0 0.0
    %68 = vmatprep.subr.mxu0 0.0
    %69 = vmatpush1.xpose.msra.mxu0 0.0
    %70 = vmatprep.subr.mxu0 0.0
    %71 = vmatpush1.xpose.msra.mxu0 0.0
    %72 = vmatprep.subr.mxu0 0.0
    %73 = vmatpush1.xpose.msra.mxu0 0.0
    %74 = vmatprep.subr.mxu0 0.0
    %75 = vmatpush1.xpose.msra.mxu0 0.0
    %76 = vmatprep.subr.mxu0 0.0
    %77 = vmatpush1.xpose.msra.mxu0 0.0
    %78 = vmatprep.subr.mxu0 0.0
    %79 = vmatpush1.xpose.msra.mxu0 0.0
    %80 = vmatprep.subr.mxu0 0.0
    %81 = vmatpush1.xpose.msra.mxu0 0.0
    %82 = vmatprep.subr.mxu0 0.0
    %83 = vmatpush1.xpose.msra.mxu0 0.0
    %84 = vmatprep.subr.mxu0 0.0
    %85 = vmatpush1.xpose.msra.mxu0 0.0
    %86 = vmatprep.subr.mxu0 0.0
    %87 = vmatpush1.xpose.msra.mxu0 0.0
    %88 = vmatprep.subr.mxu0 0.0
    %89 = vmatpush1.xpose.msra.mxu0 0.0
    %90 = vmatprep.subr.mxu0 0.0
    %91 = vmatpush1.xpose.msra.mxu0 0.0
    %92 = vmatprep.subr.mxu0 0.0
    %93 = vmatpush1.xpose.msra.mxu0 0.0
    %94 = vmatprep.subr.mxu0 0.0
    %95 = vmatpush1.xpose.msra.mxu0 0.0
    %96 = vmatprep.subr.mxu0 0.0
    %97 = vmatpush1.xpose.msra.mxu0 0.0
    %98 = vmatprep.subr.mxu0 0.0
    %99 = vmatpush1.xpose.msra.mxu0 0.0
    %100 = vmatprep.subr.mxu0 0.0
    %101 = vmatpush1.xpose.msra.mxu0 0.0
    %102 = vmatprep.mubr.f32.mxu0 0.0
    %103 = vmatmul.mubr.f32.gmra.mrb[0].mxu0 %v33
    %v104 = vpop.f32.mrb[0].mxu0
    %v105 = vadd.f32 0.0, %v104
    %v106 = vpop.f32.mrb[0].mxu0
    %107 = vdwg.mxu0
    %v108 = vsub.f32 0.0, %v17
    %v109 = vsub.f32 0.0, %v18
    %v110 = vmul.f32 %v108, 1.442695
    %v111 = vpow.pop %v110
    %v112 = vmul.f32 %v109, 1.442695
    %v113 = vpow.pop %v112
    %v114 = vadd.f32 %v111, 1.0
    %v115 = vadd.f32 %v113, 1.0
    %v116 = vrcp.pop %v114
    %v117 = vmul.f32 1.0, %v116
    %v118 = vrcp.pop %v115
    %v119 = vmul.f32 1.0, %v118
    %v120 = vlaneseq
    %v121 = vshrl.u32 %v120, 7
    %v122 = vsub.s32 0, %v121
    %v123 = vrot.slane %v105, %v122
    %125 = vset.pattern.permute.xlu0 0
    %126 = vperm.xlu0 %125, %v117
    %v127 = vpop.permute.xlu0 %126
    %v129 = vmul.f32 %v123, %v127
    %v130 = vsub.f32 1.0, %v105
    %v131 = vlaneseq
    %v132 = vshrl.u32 %v131, 7
    %v133 = vsub.s32 0, %v132
    %v134 = vrot.slane %v130, %v133
    %136 = vset.pattern.permute.xlu0 0
    %137 = vperm.xlu0 %136, %v119
    %v138 = vpop.permute.xlu0 %137
    %v140 = vmul.f32 %v134, %v138
    %v141 = vadd.f32 %v129, %v140
    %v142 = vlaneseq
    %v143 = vshrl.u32 %v142, 7
    %v144 = vsub.s32 1, %v143
    %v145 = vrot.slane %v105, %v144
    %v146 = vmul.f32 %v145, %v141
    %v147 = vlaneseq
    %v148 = vshrl.u32 %v147, 7
    %v149 = vsub.s32 1, %v148
    %v150 = vrot.slane %v130, %v149
    %v151 = vmul.f32 %v150, %v141
    %v153 = vrot.slane %v151, 4
    %v155 = vadd.f32 %v146, %v153
    %v156 = vlaneseq
    %v157 = vshrl.u32 %v156, 7
    %v158 = vsub.s32 2, %v157
    %v159 = vrot.slane %v105, %v158
    %v160 = vmul.f32 %v159, %v155
    %v161 = vlaneseq
    %v162 = vshrl.u32 %v161, 7
    %v163 = vsub.s32 2, %v162
    %v164 = vrot.slane %v130, %v163
    %v165 = vmul.f32 %v164, %v155
    %v167 = vrot.slane %v165, 2
    %v169 = vadd.f32 %v160, %v167
    %v171 = vrot.slane %v169, 5
    %v173 = vmul.f32 %v105, %v171
    %v174 = vrot.slane %v169, 6
    %v176 = vmul.f32 %v130, %v174
    %v177 = vadd.f32 %v173, %v176
    %vm178 = vcmask 60419
    %179 = vst.msk [vmem:[#allocation2 - $0x3] sm:$0x8] %vm178, %v177
    // Predicated region
    $region14: #{tpu_custom_call.1} parent=1 // pred_check
      _
    $region15: #{tpu_custom_call.1} parent=1 // pred_check_branch
      %181 = sbr.rel (0) target = $region17
    $region16: #{tpu_custom_call.1} parent=1 // pred_region
      %s183 = ssub.s32 16, 16
      %184 = vsyncadd [#allocation3], %s183
      %s186 = sshll.u32 [#allocation2], 4
      %s187 = int_to_ptr.vmem [resolvable:$true] %s186
      %189 = dma.vmem_to_hbm [thread:$0]  %s187, 16, %s3, [#allocation3]
    $region17: #{tpu_custom_call.1} parent=1 // pred_fallthru
      _
    // Predicated region
    $region18: #{tpu_custom_call.1} parent=1 // pred_check
      _
    $region19: #{tpu_custom_call.1} parent=1 // pred_check_branch
      %191 = sbr.rel (0) target = $region21
    $region20: #{tpu_custom_call.1} parent=1 // pred_region
      %192 = dma.done [#allocation3], 16
    $region21: #{tpu_custom_call.1} parent=1 // pred_fallthru
      _
    %193 = vsyncpa [#allocation3], 1

</llo_original>
